<compile_context>
chip_gen: v7x
topology: tpu7x:2x2x1
jax: 0.10.0
libtpu: 0.0.40
codegen_flags: <defaults>
</compile_context>

<pallas_src>
import math
import functools

import jax
import jax.numpy as jnp
from jax import lax
from jax.experimental import pallas as pl
from jax.experimental.pallas import tpu as pltpu


def _mha_kernel(x_ref, wqkv_ref, wo_ref, out_ref, *,
                num_heads, q_dim, v_dim, head_q, head_v,
                block_q, num_q_tiles, matmul_dtype):
    x_full = x_ref[0].astype(matmul_dtype)            # (S, D)
    w_all = wqkv_ref[...].astype(matmul_dtype)        # (2*q_dim + v_dim, D)

    if num_q_tiles == 1:
        # Single fused Q/K/V projection for ALL heads: x @ W_all^T
        # (trans-B dot_general, scale already folded into Wq).
        qkv = lax.dot_general(x_full, w_all, (((1,), (1,)), ((), ())),
                              preferred_element_type=jnp.float32)   # (S, 2q+v)
        q_all = qkv[:, :q_dim]                  # (block_q == S, q_dim)
        k_all = qkv[:, q_dim:2 * q_dim]         # (S, q_dim)
        v_all = qkv[:, 2 * q_dim:]              # (S, v_dim)
    else:
        # Q only for this tile's rows (avoids recomputing Q for the whole
        # sequence on every query tile); K/V for the full sequence.
        row0 = pl.multiple_of(pl.program_id(1) * block_q, block_q)
        x_tile = lax.dynamic_slice_in_dim(x_full, row0, block_q, axis=0)
        wq = w_all[:q_dim]                      # (q_dim, D), scale folded in
        wkv = w_all[q_dim:]                     # (q_dim + v_dim, D)
        q_all = lax.dot_general(x_tile, wq, (((1,), (1,)), ((), ())),
                                preferred_element_type=jnp.float32)  # (block_q, q_dim)
        kv = lax.dot_general(x_full, wkv, (((1,), (1,)), ((), ())),
                             preferred_element_type=jnp.float32)     # (S, q_dim + v_dim)
        k_all = kv[:, :q_dim]                   # (S, q_dim)
        v_all = kv[:, q_dim:]                   # (S, v_dim)

    ctx_heads = []
    for h in range(num_heads):                  # static unroll, all slice offsets static
        qh = q_all[:, h * head_q:(h + 1) * head_q].astype(matmul_dtype)
        kh = k_all[:, h * head_q:(h + 1) * head_q].astype(matmul_dtype)
        vh = v_all[:, h * head_v:(h + 1) * head_v].astype(matmul_dtype)

        # scores: q @ k^T without transposing k (trans-B dot_general)
        s = lax.dot_general(qh, kh, (((1,), (1,)), ((), ())),
                            preferred_element_type=jnp.float32)      # (block_q, S)
        s_max = jnp.max(s, axis=-1, keepdims=True)
        p = jnp.exp(s - s_max)
        # EUP reciprocal: occupies the otherwise-idle EUP slot instead of VPU divide.
        p = p * pl.reciprocal(jnp.sum(p, axis=-1, keepdims=True), approx=True)

        ctx = lax.dot_general(p.astype(matmul_dtype), vh,
                              (((1,), (0,)), ((), ())),
                              preferred_element_type=jnp.float32)    # (block_q, head_v)
        ctx_heads.append(ctx)

    # Lane-dense context slab for this query tile.
    ctx_cat = jnp.concatenate(ctx_heads, axis=-1)                    # (block_q, v_dim)

    # ONE full-width output projection (K = v_dim fills the MXU), single store.
    wo = wo_ref[...].astype(matmul_dtype)
    out = lax.dot_general(ctx_cat.astype(matmul_dtype), wo,
                          (((1,), (1,)), ((), ())),
                          preferred_element_type=jnp.float32)        # (block_q, v_dim)
    out_ref[0] = out.astype(out_ref.dtype)


def multi_head_attention(x, wq, wk, wv, wo, *, num_heads, block_q=None,
                         matmul_dtype=jnp.float32):
    """x: (B, S, input_dim); wq/wk: (q_dim, input_dim); wv: (v_dim, input_dim);
    wo: (v_dim, v_dim).  Returns (B, S, v_dim)."""
    B, S, D = x.shape
    q_dim = wq.shape[0]
    k_dim = wk.shape[0]
    v_dim = wv.shape[0]
    assert k_dim == q_dim, "module ties k_dim to q_dim"
    assert q_dim % num_heads == 0 and v_dim % num_heads == 0
    head_q = q_dim // num_heads
    head_v = v_dim // num_heads
    scale = math.sqrt(q_dim)  # module divides by sqrt(k_dim) == sqrt(q_dim) (NOT head_dim)

    # Query tile: bounds the (block_q, S) score buffer in VMEM and provides a second
    # parallel grid axis (both v7x TensorCores get work even when B == 1).
    if block_q is None:
        block_q = S
        for cand in (512, 256, 128):
            if S % cand == 0:
                block_q = cand
                break
    assert S % block_q == 0
    num_q_tiles = S // block_q

    # Host-side prep: fold 1/scale into Wq and stack [Wq; Wk; Wv] so the kernel does
    # one (or two, when query-tiled) lane-dense projection matmuls.
    wqkv = jnp.concatenate([wq / scale, wk, wv], axis=0)   # (2*q_dim + v_dim, D)

    kernel = functools.partial(
        _mha_kernel, num_heads=num_heads, q_dim=q_dim, v_dim=v_dim,
        head_q=head_q, head_v=head_v, block_q=block_q,
        num_q_tiles=num_q_tiles, matmul_dtype=matmul_dtype)

    return pl.pallas_call(
        kernel,
        out_shape=jax.ShapeDtypeStruct((B, S, v_dim), x.dtype),
        grid_spec=pltpu.PrefetchScalarGridSpec(
            num_scalar_prefetch=0,
            grid=(B, num_q_tiles),
            in_specs=[
                # x block index is constant over the inner (qi) axis -> DMA once per b.
                pl.BlockSpec((1, S, D), lambda b, qi: (b, 0, 0)),
                # Weights as full untiled blocks with constant index maps:
                # DMA'd once, resident in VMEM for the whole kernel.
                pl.BlockSpec((2 * q_dim + v_dim, D), lambda b, qi: (0, 0)),
                pl.BlockSpec((v_dim, v_dim), lambda b, qi: (0, 0)),
            ],
            out_specs=pl.BlockSpec((1, block_q, v_dim), lambda b, qi: (b, qi, 0)),
        ),
        compiler_params=pltpu.CompilerParams(
            dimension_semantics=("parallel", "parallel"),
        ),
    )(x, wqkv, wo)


def _reference(x, wq, wk, wv, wo, *, num_heads):
    """Pure-JAX replica of the PyTorch forward for verification."""
    B, S, D = x.shape
    q_dim = wq.shape[0]
    v_dim = wv.shape[0]
    hq = q_dim // num_heads
    hv = v_dim // num_heads
    Q = (x @ wq.T).reshape(B, S, num_heads, hq).transpose(0, 2, 1, 3)
    K = (x @ wk.T).reshape(B, S, num_heads, hq).transpose(0, 2, 1, 3)
    V = (x @ wv.T).reshape(B, S, num_heads, hv).transpose(0, 2, 1, 3)
    dist = jnp.einsum("bhqd,bhkd->bhqk", Q, K) / math.sqrt(q_dim)
    dist = jax.nn.softmax(dist, axis=-1)
    attn = jnp.einsum("bhqk,bhkd->bhqd", dist, V).transpose(0, 2, 1, 3)
    attn = attn.reshape(B, S, v_dim)
    return attn @ wo.T


if __name__ == "__main__":
    # Small, module-consistent shapes.
    batch, seq, input_dim = 2, 8, 32
    q_dim, v_dim, num_heads = 32, 32, 4

    key = jax.random.PRNGKey(0)
    kx, kq, kk, kv, ko = jax.random.split(key, 5)

    x = jax.random.normal(kx, (batch, seq, input_dim), dtype=jnp.float32)
    # Deterministic "Linear" weights (torch convention: (out_dim, in_dim), no bias).
    wq = jax.random.normal(kq, (q_dim, input_dim), dtype=jnp.float32) * 0.1
    wk = jax.random.normal(kk, (q_dim, input_dim), dtype=jnp.float32) * 0.1
    wv = jax.random.normal(kv, (v_dim, input_dim), dtype=jnp.float32) * 0.1
    wo = jax.random.normal(ko, (v_dim, v_dim), dtype=jnp.float32) * 0.1

    out = multi_head_attention(x, wq, wk, wv, wo, num_heads=num_heads)
    out = jax.block_until_ready(out)

    ref = _reference(x, wq, wk, wv, wo, num_heads=num_heads)
    assert out.shape == (batch, seq, v_dim)
    # approx=True reciprocal (EUP vrcp) introduces ~1e-4-level relative error.
    assert jnp.allclose(out, ref, atol=2e-3, rtol=2e-3), "mismatch vs reference"

    print("KERNEL_OK")
</pallas_src>

<mosaic_0001>
module attributes {stable_mosaic.version = 11 : i64} {
  func.func @_mha_kernel(%arg0: i32, %arg1: i32, %arg2: memref<1x8x32xf32, #tpu.memory_space<vmem>>, %arg3: memref<96x32xf32, #tpu.memory_space<vmem>>, %arg4: memref<32x32xf32, #tpu.memory_space<vmem>>, %arg5: memref<1x8x32xf32, #tpu.memory_space<vmem>>) attributes {dimension_semantics = [#tpu.dimension_semantics<parallel>, #tpu.dimension_semantics<parallel>], iteration_bounds = array<i64: 2, 1>, scalar_prefetch = 0 : i64, scratch_operands = 0 : i64, tpu.core_type = #tpu.core_type<tc>, window_params = [{transform_indices = @transform_0, window_bounds = array<i64: 1, 8, 32>}, {pipeline_mode = #tpu.pipeline_mode<synchronous>, transform_indices = @transform_1, window_bounds = array<i64: 96, 32>}, {pipeline_mode = #tpu.pipeline_mode<synchronous>, transform_indices = @transform_2, window_bounds = array<i64: 32, 32>}, {transform_indices = @transform_3, window_bounds = array<i64: 1, 8, 32>}]} {
    %c0 = arith.constant 0 : index
    %c0_0 = arith.constant 0 : index
    %c0_1 = arith.constant 0 : index
    %0 = vector.load %arg2[%c0, %c0_0, %c0_1] : memref<1x8x32xf32, #tpu.memory_space<vmem>>, vector<1x8x32xf32>
    %1 = vector.shape_cast %0 : vector<1x8x32xf32> to vector<8x32xf32>
    %c0_2 = arith.constant 0 : index
    %c0_3 = arith.constant 0 : index
    %2 = vector.load %arg3[%c0_2, %c0_3] : memref<96x32xf32, #tpu.memory_space<vmem>>, vector<96x32xf32>
    %cst = arith.constant dense<0.000000e+00> : vector<8x96xf32>
    %3 = tpu.matmul %1, %2, %cst {dimension_numbers = #tpu.dot_dimension_numbers<[1], [1], [0], [0], [0, 0, 1, 0], [], []>} : vector<8x32xf32>, vector<96x32xf32>, vector<8x96xf32> -> vector<8x96xf32>
    %4 = vector.extract_strided_slice %3 {offsets = [0, 0], sizes = [8, 32], strides = [1, 1]} : vector<8x96xf32> to vector<8x32xf32>
    %5 = vector.extract_strided_slice %3 {offsets = [0, 32], sizes = [8, 32], strides = [1, 1]} : vector<8x96xf32> to vector<8x32xf32>
    %6 = vector.extract_strided_slice %3 {offsets = [0, 64], sizes = [8, 32], strides = [1, 1]} : vector<8x96xf32> to vector<8x32xf32>
    %7 = vector.extract_strided_slice %4 {offsets = [0, 0], sizes = [8, 8], strides = [1, 1]} : vector<8x32xf32> to vector<8x8xf32>
    %8 = vector.extract_strided_slice %5 {offsets = [0, 0], sizes = [8, 8], strides = [1, 1]} : vector<8x32xf32> to vector<8x8xf32>
    %9 = vector.extract_strided_slice %6 {offsets = [0, 0], sizes = [8, 8], strides = [1, 1]} : vector<8x32xf32> to vector<8x8xf32>
    %cst_4 = arith.constant dense<0.000000e+00> : vector<8x8xf32>
    %10 = tpu.matmul %7, %8, %cst_4 {dimension_numbers = #tpu.dot_dimension_numbers<[1], [1], [0], [0], [0, 0, 1, 0], [], []>} : vector<8x8xf32>, vector<8x8xf32>, vector<8x8xf32> -> vector<8x8xf32>
    %cst_5 = arith.constant dense<0xFF800000> : vector<8xf32>
    %11 = vector.multi_reduction <maximumf>, %10, %cst_5 [1] : vector<8x8xf32> to vector<8xf32>
    %12 = vector.shape_cast %11 : vector<8xf32> to vector<8x1xf32>
    %13 = vector.broadcast %12 : vector<8x1xf32> to vector<8x8xf32>
    %14 = arith.subf %10, %13 : vector<8x8xf32>
    %15 = math.exp %14 : vector<8x8xf32>
    %cst_6 = arith.constant dense<0.000000e+00> : vector<8xf32>
    %16 = vector.multi_reduction <add>, %15, %cst_6 [1] : vector<8x8xf32> to vector<8xf32>
    %17 = vector.shape_cast %16 : vector<8xf32> to vector<8x1xf32>
    %18 = tpu.reciprocal %17 {approx = true} : vector<8x1xf32> -> vector<8x1xf32>
    %19 = vector.broadcast %18 : vector<8x1xf32> to vector<8x8xf32>
    %20 = arith.mulf %15, %19 : vector<8x8xf32>
    %cst_7 = arith.constant dense<0.000000e+00> : vector<8x8xf32>
    %21 = tpu.matmul %20, %9, %cst_7 {dimension_numbers = #tpu.dot_dimension_numbers<[1], [0], [0], [1], [0, 0, 1, 1], [], []>} : vector<8x8xf32>, vector<8x8xf32>, vector<8x8xf32> -> vector<8x8xf32>
    %22 = vector.extract_strided_slice %4 {offsets = [0, 8], sizes = [8, 8], strides = [1, 1]} : vector<8x32xf32> to vector<8x8xf32>
    %23 = vector.extract_strided_slice %5 {offsets = [0, 8], sizes = [8, 8], strides = [1, 1]} : vector<8x32xf32> to vector<8x8xf32>
    %24 = vector.extract_strided_slice %6 {offsets = [0, 8], sizes = [8, 8], strides = [1, 1]} : vector<8x32xf32> to vector<8x8xf32>
    %cst_8 = arith.constant dense<0.000000e+00> : vector<8x8xf32>
    %25 = tpu.matmul %22, %23, %cst_8 {dimension_numbers = #tpu.dot_dimension_numbers<[1], [1], [0], [0], [0, 0, 1, 0], [], []>} : vector<8x8xf32>, vector<8x8xf32>, vector<8x8xf32> -> vector<8x8xf32>
    %cst_9 = arith.constant dense<0xFF800000> : vector<8xf32>
    %26 = vector.multi_reduction <maximumf>, %25, %cst_9 [1] : vector<8x8xf32> to vector<8xf32>
    %27 = vector.shape_cast %26 : vector<8xf32> to vector<8x1xf32>
    %28 = vector.broadcast %27 : vector<8x1xf32> to vector<8x8xf32>
    %29 = arith.subf %25, %28 : vector<8x8xf32>
    %30 = math.exp %29 : vector<8x8xf32>
    %cst_10 = arith.constant dense<0.000000e+00> : vector<8xf32>
    %31 = vector.multi_reduction <add>, %30, %cst_10 [1] : vector<8x8xf32> to vector<8xf32>
    %32 = vector.shape_cast %31 : vector<8xf32> to vector<8x1xf32>
    %33 = tpu.reciprocal %32 {approx = true} : vector<8x1xf32> -> vector<8x1xf32>
    %34 = vector.broadcast %33 : vector<8x1xf32> to vector<8x8xf32>
    %35 = arith.mulf %30, %34 : vector<8x8xf32>
    %cst_11 = arith.constant dense<0.000000e+00> : vector<8x8xf32>
    %36 = tpu.matmul %35, %24, %cst_11 {dimension_numbers = #tpu.dot_dimension_numbers<[1], [0], [0], [1], [0, 0, 1, 1], [], []>} : vector<8x8xf32>, vector<8x8xf32>, vector<8x8xf32> -> vector<8x8xf32>
    %37 = vector.extract_strided_slice %4 {offsets = [0, 16], sizes = [8, 8], strides = [1, 1]} : vector<8x32xf32> to vector<8x8xf32>
    %38 = vector.extract_strided_slice %5 {offsets = [0, 16], sizes = [8, 8], strides = [1, 1]} : vector<8x32xf32> to vector<8x8xf32>
    %39 = vector.extract_strided_slice %6 {offsets = [0, 16], sizes = [8, 8], strides = [1, 1]} : vector<8x32xf32> to vector<8x8xf32>
    %cst_12 = arith.constant dense<0.000000e+00> : vector<8x8xf32>
    %40 = tpu.matmul %37, %38, %cst_12 {dimension_numbers = #tpu.dot_dimension_numbers<[1], [1], [0], [0], [0, 0, 1, 0], [], []>} : vector<8x8xf32>, vector<8x8xf32>, vector<8x8xf32> -> vector<8x8xf32>
    %cst_13 = arith.constant dense<0xFF800000> : vector<8xf32>
    %41 = vector.multi_reduction <maximumf>, %40, %cst_13 [1] : vector<8x8xf32> to vector<8xf32>
    %42 = vector.shape_cast %41 : vector<8xf32> to vector<8x1xf32>
    %43 = vector.broadcast %42 : vector<8x1xf32> to vector<8x8xf32>
    %44 = arith.subf %40, %43 : vector<8x8xf32>
    %45 = math.exp %44 : vector<8x8xf32>
    %cst_14 = arith.constant dense<0.000000e+00> : vector<8xf32>
    %46 = vector.multi_reduction <add>, %45, %cst_14 [1] : vector<8x8xf32> to vector<8xf32>
    %47 = vector.shape_cast %46 : vector<8xf32> to vector<8x1xf32>
    %48 = tpu.reciprocal %47 {approx = true} : vector<8x1xf32> -> vector<8x1xf32>
    %49 = vector.broadcast %48 : vector<8x1xf32> to vector<8x8xf32>
    %50 = arith.mulf %45, %49 : vector<8x8xf32>
    %cst_15 = arith.constant dense<0.000000e+00> : vector<8x8xf32>
    %51 = tpu.matmul %50, %39, %cst_15 {dimension_numbers = #tpu.dot_dimension_numbers<[1], [0], [0], [1], [0, 0, 1, 1], [], []>} : vector<8x8xf32>, vector<8x8xf32>, vector<8x8xf32> -> vector<8x8xf32>
    %52 = vector.extract_strided_slice %4 {offsets = [0, 24], sizes = [8, 8], strides = [1, 1]} : vector<8x32xf32> to vector<8x8xf32>
    %53 = vector.extract_strided_slice %5 {offsets = [0, 24], sizes = [8, 8], strides = [1, 1]} : vector<8x32xf32> to vector<8x8xf32>
    %54 = vector.extract_strided_slice %6 {offsets = [0, 24], sizes = [8, 8], strides = [1, 1]} : vector<8x32xf32> to vector<8x8xf32>
    %cst_16 = arith.constant dense<0.000000e+00> : vector<8x8xf32>
    %55 = tpu.matmul %52, %53, %cst_16 {dimension_numbers = #tpu.dot_dimension_numbers<[1], [1], [0], [0], [0, 0, 1, 0], [], []>} : vector<8x8xf32>, vector<8x8xf32>, vector<8x8xf32> -> vector<8x8xf32>
    %cst_17 = arith.constant dense<0xFF800000> : vector<8xf32>
    %56 = vector.multi_reduction <maximumf>, %55, %cst_17 [1] : vector<8x8xf32> to vector<8xf32>
    %57 = vector.shape_cast %56 : vector<8xf32> to vector<8x1xf32>
    %58 = vector.broadcast %57 : vector<8x1xf32> to vector<8x8xf32>
    %59 = arith.subf %55, %58 : vector<8x8xf32>
    %60 = math.exp %59 : vector<8x8xf32>
    %cst_18 = arith.constant dense<0.000000e+00> : vector<8xf32>
    %61 = vector.multi_reduction <add>, %60, %cst_18 [1] : vector<8x8xf32> to vector<8xf32>
    %62 = vector.shape_cast %61 : vector<8xf32> to vector<8x1xf32>
    %63 = tpu.reciprocal %62 {approx = true} : vector<8x1xf32> -> vector<8x1xf32>
    %64 = vector.broadcast %63 : vector<8x1xf32> to vector<8x8xf32>
    %65 = arith.mulf %60, %64 : vector<8x8xf32>
    %cst_19 = arith.constant dense<0.000000e+00> : vector<8x8xf32>
    %66 = tpu.matmul %65, %54, %cst_19 {dimension_numbers = #tpu.dot_dimension_numbers<[1], [0], [0], [1], [0, 0, 1, 1], [], []>} : vector<8x8xf32>, vector<8x8xf32>, vector<8x8xf32> -> vector<8x8xf32>
    %67 = tpu.concatenate %21, %36, %51, %66 in 1 : vector<8x8xf32>, vector<8x8xf32>, vector<8x8xf32>, vector<8x8xf32> -> vector<8x32xf32>
    %c0_20 = arith.constant 0 : index
    %c0_21 = arith.constant 0 : index
    %68 = vector.load %arg4[%c0_20, %c0_21] : memref<32x32xf32, #tpu.memory_space<vmem>>, vector<32x32xf32>
    %cst_22 = arith.constant dense<0.000000e+00> : vector<8x32xf32>
    %69 = tpu.matmul %67, %68, %cst_22 {dimension_numbers = #tpu.dot_dimension_numbers<[1], [1], [0], [0], [0, 0, 1, 0], [], []>} : vector<8x32xf32>, vector<32x32xf32>, vector<8x32xf32> -> vector<8x32xf32>
    %c0_23 = arith.constant 0 : index
    %c0_24 = arith.constant 0 : index
    %c0_25 = arith.constant 0 : index
    %70 = vector.load %arg5[%c0_23, %c0_24, %c0_25] : memref<1x8x32xf32, #tpu.memory_space<vmem>>, vector<1x8x32xf32>
    %71 = vector.shape_cast %70 : vector<1x8x32xf32> to vector<8x32xf32>
    %72 = vector.shape_cast %69 : vector<8x32xf32> to vector<1x8x32xf32>
    tpu.vector_store %arg5[%c0_23, %c0_24, %c0_25], %72 {strides = array<i32>} : memref<1x8x32xf32, #tpu.memory_space<vmem>>, vector<1x8x32xf32>,
    return
  }
  func.func @transform_0(%arg0: i32, %arg1: i32) -> (i32, i32, i32) {
    %c0_i32 = arith.constant 0 : i32
    %c0_i32_0 = arith.constant 0 : i32
    %c0_i32_1 = arith.constant 0 : i32
    return %arg0, %c0_i32, %c0_i32_0 : i32, i32, i32
  }
  func.func @transform_1(%arg0: i32, %arg1: i32) -> (i32, i32) {
    %c0_i32 = arith.constant 0 : i32
    %c0_i32_0 = arith.constant 0 : i32
    %c0_i32_1 = arith.constant 0 : i32
    return %c0_i32, %c0_i32_0 : i32, i32
  }
  func.func @transform_2(%arg0: i32, %arg1: i32) -> (i32, i32) {
    %c0_i32 = arith.constant 0 : i32
    %c0_i32_0 = arith.constant 0 : i32
    %c0_i32_1 = arith.constant 0 : i32
    return %c0_i32, %c0_i32_0 : i32, i32
  }
  func.func @transform_3(%arg0: i32, %arg1: i32) -> (i32, i32, i32) {
    %c0_i32 = arith.constant 0 : i32
    %c0_i32_0 = arith.constant 0 : i32
    return %arg0, %arg1, %c0_i32 : i32, i32, i32
  }
}

</mosaic_0001>

<llo_original>
// kernel: tpu_custom_call.1
$region0: #{tpu_custom_call.1}
  #allocation0 [shape = 'u32[]', space=smem, size = 0x4, offset = 0x4, fixed_abs, tag = 'smem constant byte address 0x4 - core index']
  #allocation1 [shape = 'u32[144,128]{1,0:T(1,128)}', space=vmem, size = 0x12000, scoped, tag = 'internal scratch']
  %s0 = inlined_call_operand.vmem [shape: f32[2,8,32], index: 0, kind: input, shape index: {}]
  %s1 = inlined_call_operand.vmem [shape: f32[96,32], index: 1, kind: input, shape index: {}]
  %s2 = inlined_call_operand.vmem [shape: f32[32,32], index: 2, kind: input, shape index: {}]
  %s3 = inlined_call_operand.hbm [shape: f32[2,8,32], index: 3, kind: output, shape index: {}]
  %s4 = sld [smem:[#allocation0]]
  $region45: #{tpu_custom_call.1} parent=0
    _
  %s6 = ssub.s32 1, %s4
  %s7 = scalar_select 0, %s6, %s4
  $region1: #{tpu_custom_call.1} parent=0
    #allocation2 [shape = 'u8[8192]{0}', space=vmem, size = 0x2000, scoped, tag = 'output window, operand 0']
    #allocation3 [shape = 's32[2]{0}', space=sflag, size = 0x8, scoped, tag = 'scoped memory for tpu_custom_call.1']
    %8 = vsyncpa [#allocation3], 0
    %s9 = scalar_lea.sflag [#allocation3], 1
    %10 = vsyncpa %s9, 0
    loop: start=0, step=1, limit=4
    $region2: #{tpu_custom_call.1} parent=1 // loop_pre_header
      _
    $region3: #{tpu_custom_call.1} parent=1 // loop_header
      %s12 = sphi 0, %s16
      %p13 = scmp.ge.s32.totalorder %s12, 4
      %s19 = sphi 0, %s31
      %s20 = sphi 0, %s27
      %s21 = sphi 0, %s19
      %s22 = sphi 0, %s20
      %s23 = sphi 0, %s21
      %s24 = sphi 0, %s22
      %s34 = sphi 0, %s36
      %s37 = sphi 0, %s34
      %s38 = sphi 0, %s37
      %s54 = sphi 0, %s38
      %s58 = sphi 0, %s58
      %s60 = sphi 0, %s58
      %s61 = sphi 0, %s60
      %s75 = sphi 0, %s61
      %s79 = sphi 0, %s79
      %s81 = sphi 0, %s79
      %s82 = sphi 0, %s81
      %s96 = sphi 0, %s82
      %s104 = sphi 0, %s106
      %s107 = sphi 0, %s104
      %s108 = sphi 0, %s107
      %s124 = sphi 0, %s108
    $region4: #{tpu_custom_call.1} parent=1 // loop_header_branch
      %15 = sbr.rel (%p13) target = $region8
    $region5: #{tpu_custom_call.1} parent=1 // loop_body
      %s17 = ssub.s32 %s12, 1
      %s18 = ssub.s32 %s12, 2
      %s25 = sadd.s32 1, %s20
      %p26 = scmp.ge.s32.totalorder %s25, 1
      %s27 = scalar_select %p26, 0, %s25
      %s28 = sadd.s32 1, %s19
      %s29 = scalar_select %p26, %s28, %s19
      %p30 = scmp.ge.s32.totalorder %s29, 2
      %s31 = scalar_select %p30, 0, %s29
      %s32 = ssub.s32 %s19, %s31
      %p33 = scmp.eq.s32.totalorder %s32, 0
      %s35 = sadd.s32 %s34, 1
      %s36 = scalar_select %p33, %s34, %s35
      %p39 = pneg %p33
      %p40 = scmp.eq.s32.totalorder %s12, 1
      %p41 = por %p39, %p40
      %p42 = scmp.ne.s32.totalorder %s34, %s37
      %p43 = scmp.eq.s32.totalorder %s12, 0
      %p44 = por %p42, %p43
      %p45 = scmp.ne.s32.totalorder %s34, %s37
      %p46 = scmp.eq.s32.totalorder %s17, 1
      %p47 = por %p45, %p46
      %p48 = scmp.ne.s32.totalorder %s37, %s38
      %p49 = scmp.eq.s32.totalorder %s17, 0
      %p50 = por %p48, %p49
      %p51 = scmp.ne.s32.totalorder %s37, %s38
      %p52 = scmp.eq.s32.totalorder %s18, 1
      %p53 = por %p51, %p52
      %p55 = scmp.ne.s32.totalorder %s38, %s54
      %p56 = scmp.eq.s32.totalorder %s18, 0
      %p57 = por %p55, %p56
      %s59 = sadd.s32 %s58, 1
      %p62 = scmp.eq.s32.totalorder %s12, 1
      %p63 = scmp.ne.s32.totalorder %s58, %s60
      %p64 = scmp.eq.s32.totalorder %s12, 0
      %p65 = por %p63, %p64
      %p66 = scmp.ne.s32.totalorder %s58, %s60
      %p67 = scmp.eq.s32.totalorder %s17, 1
      %p68 = por %p66, %p67
      %p69 = scmp.ne.s32.totalorder %s60, %s61
      %p70 = scmp.eq.s32.totalorder %s17, 0
      %p71 = por %p69, %p70
      %p72 = scmp.ne.s32.totalorder %s60, %s61
      %p73 = scmp.eq.s32.totalorder %s18, 1
      %p74 = por %p72, %p73
      %p76 = scmp.ne.s32.totalorder %s61, %s75
      %p77 = scmp.eq.s32.totalorder %s18, 0
      %p78 = por %p76, %p77
      %s80 = sadd.s32 %s79, 1
      %p83 = scmp.eq.s32.totalorder %s12, 1
      %p84 = scmp.ne.s32.totalorder %s79, %s81
      %p85 = scmp.eq.s32.totalorder %s12, 0
      %p86 = por %p84, %p85
      %p87 = scmp.ne.s32.totalorder %s79, %s81
      %p88 = scmp.eq.s32.totalorder %s17, 1
      %p89 = por %p87, %p88
      %p90 = scmp.ne.s32.totalorder %s81, %s82
      %p91 = scmp.eq.s32.totalorder %s17, 0
      %p92 = por %p90, %p91
      %p93 = scmp.ne.s32.totalorder %s81, %s82
      %p94 = scmp.eq.s32.totalorder %s18, 1
      %p95 = por %p93, %p94
      %p97 = scmp.ne.s32.totalorder %s82, %s96
      %p98 = scmp.eq.s32.totalorder %s18, 0
      %p99 = por %p97, %p98
      %s100 = ssub.s32 %s19, %s31
      %s101 = ssub.s32 %s20, %s27
      %s102 = sor.u32 %s100, %s101
      %p103 = scmp.eq.s32.totalorder %s102, 0
      %s105 = sadd.s32 %s104, 1
      %s106 = scalar_select %p103, %s104, %s105
      %p109 = pneg %p103
      %p110 = scmp.eq.s32.totalorder %s12, 1
      %p111 = por %p109, %p110
      %p112 = scmp.ne.s32.totalorder %s104, %s107
      %p113 = scmp.eq.s32.totalorder %s12, 0
      %p114 = por %p112, %p113
      %p115 = scmp.ne.s32.totalorder %s104, %s107
      %p116 = scmp.eq.s32.totalorder %s17, 1
      %p117 = por %p115, %p116
      %p118 = scmp.ne.s32.totalorder %s107, %s108
      %p119 = scmp.eq.s32.totalorder %s17, 0
      %p120 = por %p118, %p119
      %p121 = scmp.ne.s32.totalorder %s107, %s108
      %p122 = scmp.eq.s32.totalorder %s18, 1
      %p123 = por %p121, %p122
      %p125 = scmp.ne.s32.totalorder %s108, %s124
      %p126 = scmp.eq.s32.totalorder %s18, 0
      %p127 = por %p125, %p126
      %p128 = scmp.le.s32.totalorder 1, %s12
      %p129 = scmp.lt.s32.totalorder %s12, 3
      %p130 = pnand %p128, %p129
      %p131 = pneg %p130
      // Predicated region
      $region9: #{tpu_custom_call.1} parent=5 // pred_check
        _
      $region10: #{tpu_custom_call.1} parent=5 // pred_check_branch
        %133 = sbr.rel (%p130) target = $region12
      $region11: #{tpu_custom_call.1} parent=5 // pred_region
        %s134 = ssub.s32 %s12, 1
        // Predicated region
        $region13: #{tpu_custom_call.1} parent=11 // pred_check
          %p135 = pneg %p71
        $region14: #{tpu_custom_call.1} parent=11 // pred_check_branch
          %137 = sbr.rel (%p135) target = $region16
        $region15: #{tpu_custom_call.1} parent=11 // pred_region
          _
        $region16: #{tpu_custom_call.1} parent=11 // pred_fallthru
          _
        // Predicated region
        $region17: #{tpu_custom_call.1} parent=11 // pred_check
          %p138 = pneg %p92
        $region18: #{tpu_custom_call.1} parent=11 // pred_check_branch
          %140 = sbr.rel (%p138) target = $region20
        $region19: #{tpu_custom_call.1} parent=11 // pred_region
          _
        $region20: #{tpu_custom_call.1} parent=11 // pred_fallthru
          _
      $region12: #{tpu_custom_call.1} parent=5 // pred_fallthru
        _
      %p141 = scmp.lt.s32.totalorder %s12, 2
      // Predicated region
      $region21: #{tpu_custom_call.1} parent=5 // pred_check
        %p142 = pneg %p141
      $region22: #{tpu_custom_call.1} parent=5 // pred_check_branch
        %144 = sbr.rel (%p142) target = $region24
      $region23: #{tpu_custom_call.1} parent=5 // pred_region
        // Predicated region
        $region25: #{tpu_custom_call.1} parent=23 // pred_check
          %p145 = pneg %p44
        $region26: #{tpu_custom_call.1} parent=23 // pred_check_branch
          %147 = sbr.rel (%p145) target = $region28
        $region27: #{tpu_custom_call.1} parent=23 // pred_region
          %p148 = scmp.lt.s32.totalorder %s19, 1
          %s149 = scalar_select %p148, %s19, 1
          %s150 = smul.addr %s149, 8
          %s151 = scalar_lea.vmem %s0, %s150
        $region28: #{tpu_custom_call.1} parent=23 // pred_fallthru
          _
      $region24: #{tpu_custom_call.1} parent=5 // pred_fallthru
        _
      %p152 = scmp.le.s32.totalorder 1, %s12
      %p153 = scmp.lt.s32.totalorder %s12, 3
      %p154 = pnand %p152, %p153
      %p155 = pneg %p154
      // Predicated region
      $region29: #{tpu_custom_call.1} parent=5 // pred_check
        _
      $region30: #{tpu_custom_call.1} parent=5 // pred_check_branch
        %157 = sbr.rel (%p154) target = $region32
      $region31: #{tpu_custom_call.1} parent=5 // pred_region
        %s158 = ssub.s32 %s12, 1
        %p159 = scmp.lt.s32.totalorder %s21, 1
        %s160 = scalar_select %p159, %s21, 1
        %s161 = smul.addr %s160, 8
        %s162 = scalar_lea.vmem %s0, %s161
        %p163 = pneg %p50
        %p164 = pneg %p47
        %p165 = pneg %p71
        %p166 = pneg %p68
        %p167 = pneg %p92
        %p168 = pneg %p89
        %p169 = pneg %p120
        %p170 = pneg %p117
        %s171 = sand.u32 %s107, 1
        %s172 = scalar_lea.sflag [#allocation3], %s171
        %s173 = sand.u32 %s107, 1
        %s174 = smul.addr %s173, 8
        %s175 = scalar_lea.vmem [#allocation2], %s174
        %p176 = scmp.lt.s32.totalorder %s21, 1
        %s177 = scalar_select %p176, %s21, 1
        %s178 = smul.addr %s177, 8
        %s179 = scalar_lea.vmem %s0, %s178
        %v180 = vld [vmem:[%s179] sm:$0xff]
        %v181 = vld [vmem:[%s1] sm:$0xff]
        %v182 = vld [vmem:[%s1 + $0x8] sm:$0xff]
        %v183 = vld [vmem:[%s1 + $0x10] sm:$0xff]
        %v184 = vld [vmem:[%s1 + $0x18] sm:$0xff]
        %v185 = vld [vmem:[%s1 + $0x20] sm:$0xff]
        %v186 = vld [vmem:[%s1 + $0x28] sm:$0xff]
        %v187 = vld [vmem:[%s1 + $0x30] sm:$0xff]
        %v188 = vld [vmem:[%s1 + $0x38] sm:$0xff]
        %v189 = vld [vmem:[%s1 + $0x40] sm:$0xff]
        %v190 = vld [vmem:[%s1 + $0x48] sm:$0xff]
        %v191 = vld [vmem:[%s1 + $0x50] sm:$0xff]
        %v192 = vld [vmem:[%s1 + $0x58] sm:$0xff]
        %vm193 = vcmask 261120
        %v195 = vsel %vm193, %v180, 0
        %v198 = vsel %vm193, %v181, 0
        %v201 = vsel %vm193, %v182, 0
        %v204 = vsel %vm193, %v183, 0
        %v207 = vsel %vm193, %v184, 0
        %v210 = vsel %vm193, %v185, 0
        %v213 = vsel %vm193, %v186, 0
        %v216 = vsel %vm193, %v187, 0
        %v219 = vsel %vm193, %v188, 0
        %v222 = vsel %vm193, %v189, 0
        %v225 = vsel %vm193, %v190, 0
        %v228 = vsel %vm193, %v191, 0
        %v231 = vsel %vm193, %v192, 0
        %233 = vmatprep.subr.mxu0 0.0
        %234 = vmatpush1.xpose.msra.mxu0 %v198
        %235 = vmatprep.subr.mxu0 0.0
        %236 = vmatpush1.xpose.msra.mxu0 %v201
        %237 = vmatprep.subr.mxu0 0.0
        %238 = vmatpush1.xpose.msra.mxu0 %v204
        %239 = vmatprep.subr.mxu0 0.0
        %240 = vmatpush1.xpose.msra.mxu0 %v207
        %241 = vmatprep.subr.mxu0 0.0
        %242 = vmatpush1.xpose.msra.mxu0 %v210
        %243 = vmatprep.subr.mxu0 0.0
        %244 = vmatpush1.xpose.msra.mxu0 %v213
        %245 = vmatprep.subr.mxu0 0.0
        %246 = vmatpush1.xpose.msra.mxu0 %v216
        %247 = vmatprep.subr.mxu0 0.0
        %248 = vmatpush1.xpose.msra.mxu0 %v219
        %249 = vmatprep.subr.mxu0 0.0
        %250 = vmatpush1.xpose.msra.mxu0 %v222
        %251 = vmatprep.subr.mxu0 0.0
        %252 = vmatpush1.xpose.msra.mxu0 %v225
        %253 = vmatprep.subr.mxu0 0.0
        %254 = vmatpush1.xpose.msra.mxu0 %v228
        %255 = vmatprep.subr.mxu0 0.0
        %256 = vmatpush1.xpose.msra.mxu0 %v231
        %257 = vmatprep.subr.mxu0 0.0
        %258 = vmatpush1.xpose.msra.mxu0 0.0
        %259 = vmatprep.subr.mxu0 0.0
        %260 = vmatpush1.xpose.msra.mxu0 0.0
        %261 = vmatprep.subr.mxu0 0.0
        %262 = vmatpush1.xpose.msra.mxu0 0.0
        %263 = vmatprep.subr.mxu0 0.0
        %264 = vmatpush1.xpose.msra.mxu0 0.0
        %265 = vmatprep.subr.mxu0 0.0
        %266 = vmatpush1.xpose.msra.mxu0 0.0
        %267 = vmatprep.subr.mxu0 0.0
        %268 = vmatpush1.xpose.msra.mxu0 0.0
        %269 = vmatprep.subr.mxu0 0.0
        %270 = vmatpush1.xpose.msra.mxu0 0.0
        %271 = vmatprep.subr.mxu0 0.0
        %272 = vmatpush1.xpose.msra.mxu0 0.0
        %273 = vmatprep.subr.mxu0 0.0
        %274 = vmatpush1.xpose.msra.mxu0 0.0
        %275 = vmatprep.subr.mxu0 0.0
        %276 = vmatpush1.xpose.msra.mxu0 0.0
        %277 = vmatprep.subr.mxu0 0.0
        %278 = vmatpush1.xpose.msra.mxu0 0.0
        %279 = vmatprep.subr.mxu0 0.0
        %280 = vmatpush1.xpose.msra.mxu0 0.0
        %281 = vmatprep.subr.mxu0 0.0
        %282 = vmatpush1.xpose.msra.mxu0 0.0
        %283 = vmatprep.subr.mxu0 0.0
        %284 = vmatpush1.xpose.msra.mxu0 0.0
        %285 = vmatprep.subr.mxu0 0.0
        %286 = vmatpush1.xpose.msra.mxu0 0.0
        %287 = vmatprep.subr.mxu0 0.0
        %288 = vmatpush1.xpose.msra.mxu0 0.0
        %289 = vmatprep.subr.mxu0 0.0
        %290 = vmatpush1.xpose.msra.mxu0 0.0
        %291 = vmatprep.subr.mxu0 0.0
        %292 = vmatpush1.xpose.msra.mxu0 0.0
        %293 = vmatprep.subr.mxu0 0.0
        %294 = vmatpush1.xpose.msra.mxu0 0.0
        %295 = vmatprep.subr.mxu0 0.0
        %296 = vmatpush1.xpose.msra.mxu0 0.0
        %297 = vmatprep.mubr.f32.mxu0 0.0
        %298 = vmatmul.mubr.f32.gmra.mrb[0].mxu0 %v195
        %v299 = vpop.f32.mrb[0].mxu0
        %v300 = vadd.f32 0.0, %v299
        %v301 = vpop.f32.mrb[0].mxu0
        %302 = vdwg.mxu0
        %304 = vrot.lane.b32.xlu0 %v300, 96
        %v305 = vpop.permute.xlu0 %304
        %vm306 = vcmask 64512
        %v307 = vsel %vm306, %v300, 0
        %v309 = vsel %vm306, %v305, 0
        %311 = vmatprep.subr.mxu0 0.0
        %312 = vmatpush1.xpose.msra.mxu0 %v309
        %313 = vmatprep.subr.mxu0 0.0
        %314 = vmatpush1.xpose.msra.mxu0 0.0
        %315 = vmatprep.subr.mxu0 0.0
        %316 = vmatpush1.xpose.msra.mxu0 0.0
        %317 = vmatprep.subr.mxu0 0.0
        %318 = vmatpush1.xpose.msra.mxu0 0.0
        %319 = vmatprep.subr.mxu0 0.0
        %320 = vmatpush1.xpose.msra.mxu0 0.0
        %321 = vmatprep.subr.mxu0 0.0
        %322 = vmatpush1.xpose.msra.mxu0 0.0
        %323 = vmatprep.subr.mxu0 0.0
        %324 = vmatpush1.xpose.msra.mxu0 0.0
        %325 = vmatprep.subr.mxu0 0.0
        %326 = vmatpush1.xpose.msra.mxu0 0.0
        %327 = vmatprep.subr.mxu0 0.0
        %328 = vmatpush1.xpose.msra.mxu0 0.0
        %329 = vmatprep.subr.mxu0 0.0
        %330 = vmatpush1.xpose.msra.mxu0 0.0
        %331 = vmatprep.subr.mxu0 0.0
        %332 = vmatpush1.xpose.msra.mxu0 0.0
        %333 = vmatprep.subr.mxu0 0.0
        %334 = vmatpush1.xpose.msra.mxu0 0.0
        %335 = vmatprep.subr.mxu0 0.0
        %336 = vmatpush1.xpose.msra.mxu0 0.0
        %337 = vmatprep.subr.mxu0 0.0
        %338 = vmatpush1.xpose.msra.mxu0 0.0
        %339 = vmatprep.subr.mxu0 0.0
        %340 = vmatpush1.xpose.msra.mxu0 0.0
        %341 = vmatprep.subr.mxu0 0.0
        %342 = vmatpush1.xpose.msra.mxu0 0.0
        %343 = vmatprep.subr.mxu0 0.0
        %344 = vmatpush1.xpose.msra.mxu0 0.0
        %345 = vmatprep.subr.mxu0 0.0
        %346 = vmatpush1.xpose.msra.mxu0 0.0
        %347 = vmatprep.subr.mxu0 0.0
        %348 = vmatpush1.xpose.msra.mxu0 0.0
        %349 = vmatprep.subr.mxu0 0.0
        %350 = vmatpush1.xpose.msra.mxu0 0.0
        %351 = vmatprep.subr.mxu0 0.0
        %352 = vmatpush1.xpose.msra.mxu0 0.0
        %353 = vmatprep.subr.mxu0 0.0
        %354 = vmatpush1.xpose.msra.mxu0 0.0
        %355 = vmatprep.subr.mxu0 0.0
        %356 = vmatpush1.xpose.msra.mxu0 0.0
        %357 = vmatprep.subr.mxu0 0.0
        %358 = vmatpush1.xpose.msra.mxu0 0.0
        %359 = vmatprep.subr.mxu0 0.0
        %360 = vmatpush1.xpose.msra.mxu0 0.0
        %361 = vmatprep.subr.mxu0 0.0
        %362 = vmatpush1.xpose.msra.mxu0 0.0
        %363 = vmatprep.subr.mxu0 0.0
        %364 = vmatpush1.xpose.msra.mxu0 0.0
        %365 = vmatprep.subr.mxu0 0.0
        %366 = vmatpush1.xpose.msra.mxu0 0.0
        %367 = vmatprep.subr.mxu0 0.0
        %368 = vmatpush1.xpose.msra.mxu0 0.0
        %369 = vmatprep.subr.mxu0 0.0
        %370 = vmatpush1.xpose.msra.mxu0 0.0
        %371 = vmatprep.subr.mxu0 0.0
        %372 = vmatpush1.xpose.msra.mxu0 0.0
        %373 = vmatprep.subr.mxu0 0.0
        %374 = vmatpush1.xpose.msra.mxu0 0.0
        %375 = vmatprep.mubr.f32.mxu0 0.0
        %376 = vmatmul.mubr.f32.gmra.mrb[0].mxu0 %v307
        %v377 = vpop.f32.mrb[0].mxu0
        %v378 = vadd.f32 0.0, %v377
        %v379 = vpop.f32.mrb[0].mxu0
        %380 = vdwg.mxu0
        %v381 = vsel %vm306, %v378, -inf
        %382 = vmax.xlane.f32.xlu0 %v381
        %v383 = vpop.xlane.xlu0 %382
        %v384 = vsub.f32 %v378, %v383
        %v385 = vmul.f32 %v384, 1.442695
        %v386 = vpow.pop %v385
        %v387 = vsel %vm306, %v386, 0.0
        %388 = vadd.xlane.f32.xlu0 %v387
        %v389 = vpop.xlane.xlu0 %388
        %v390 = vrcp.pop %v389
        %v391 = vmul.f32 %v386, %v390
        %392 = vrot.lane.b32.xlu0 %v300, 64
        %v393 = vpop.permute.xlu0 %392
        %v396 = vsel %vm306, %v391, 0
        %398 = vmatprep.subr.mxu0 0.0
        %399 = vmatpush1.msra.mxu0 %v393
        %400 = vmatprep.subr.mxu0 0.0
        %401 = vmatpush1.msra.mxu0 0.0
        %402 = vmatprep.subr.mxu0 0.0
        %403 = vmatpush1.msra.mxu0 0.0
        %404 = vmatprep.subr.mxu0 0.0
        %405 = vmatpush1.msra.mxu0 0.0
        %406 = vmatprep.subr.mxu0 0.0
        %407 = vmatpush1.msra.mxu0 0.0
        %408 = vmatprep.subr.mxu0 0.0
        %409 = vmatpush1.msra.mxu0 0.0
        %410 = vmatprep.subr.mxu0 0.0
        %411 = vmatpush1.msra.mxu0 0.0
        %412 = vmatprep.subr.mxu0 0.0
        %413 = vmatpush1.msra.mxu0 0.0
        %414 = vmatprep.subr.mxu0 0.0
        %415 = vmatpush1.msra.mxu0 0.0
        %416 = vmatprep.subr.mxu0 0.0
        %417 = vmatpush1.msra.mxu0 0.0
        %418 = vmatprep.subr.mxu0 0.0
        %419 = vmatpush1.msra.mxu0 0.0
        %420 = vmatprep.subr.mxu0 0.0
        %421 = vmatpush1.msra.mxu0 0.0
        %422 = vmatprep.subr.mxu0 0.0
        %423 = vmatpush1.msra.mxu0 0.0
        %424 = vmatprep.subr.mxu0 0.0
        %425 = vmatpush1.msra.mxu0 0.0
        %426 = vmatprep.subr.mxu0 0.0
        %427 = vmatpush1.msra.mxu0 0.0
        %428 = vmatprep.subr.mxu0 0.0
        %429 = vmatpush1.msra.mxu0 0.0
        %430 = vmatprep.subr.mxu0 0.0
        %431 = vmatpush1.msra.mxu0 0.0
        %432 = vmatprep.subr.mxu0 0.0
        %433 = vmatpush1.msra.mxu0 0.0
        %434 = vmatprep.subr.mxu0 0.0
        %435 = vmatpush1.msra.mxu0 0.0
        %436 = vmatprep.subr.mxu0 0.0
        %437 = vmatpush1.msra.mxu0 0.0
        %438 = vmatprep.subr.mxu0 0.0
        %439 = vmatpush1.msra.mxu0 0.0
        %440 = vmatprep.subr.mxu0 0.0
        %441 = vmatpush1.msra.mxu0 0.0
        %442 = vmatprep.subr.mxu0 0.0
        %443 = vmatpush1.msra.mxu0 0.0
        %444 = vmatprep.subr.mxu0 0.0
        %445 = vmatpush1.msra.mxu0 0.0
        %446 = vmatprep.subr.mxu0 0.0
        %447 = vmatpush1.msra.mxu0 0.0
        %448 = vmatprep.subr.mxu0 0.0
        %449 = vmatpush1.msra.mxu0 0.0
        %450 = vmatprep.subr.mxu0 0.0
        %451 = vmatpush1.msra.mxu0 0.0
        %452 = vmatprep.subr.mxu0 0.0
        %453 = vmatpush1.msra.mxu0 0.0
        %454 = vmatprep.subr.mxu0 0.0
        %455 = vmatpush1.msra.mxu0 0.0
        %456 = vmatprep.subr.mxu0 0.0
        %457 = vmatpush1.msra.mxu0 0.0
        %458 = vmatprep.subr.mxu0 0.0
        %459 = vmatpush1.msra.mxu0 0.0
        %460 = vmatprep.subr.mxu0 0.0
        %461 = vmatpush1.msra.mxu0 0.0
        %462 = vmatprep.mubr.f32.mxu0 0.0
        %463 = vmatmul.mubr.f32.gmra.mrb[0].mxu0 %v396
        %v464 = vpop.f32.mrb[0].mxu0
        %v465 = vadd.f32 0.0, %v464
        %v466 = vpop.f32.mrb[0].mxu0
        %467 = vdwg.mxu0
        %468 = vrot.lane.b32.xlu0 %v300, 120
        %v469 = vpop.permute.xlu0 %468
        %470 = vrot.lane.b32.xlu0 %v300, 88
        %v471 = vpop.permute.xlu0 %470
        %v472 = vsel %vm306, %v469, 0
        %v474 = vsel %vm306, %v471, 0
        %476 = vmatprep.subr.mxu0 0.0
        %477 = vmatpush1.xpose.msra.mxu0 %v474
        %478 = vmatprep.subr.mxu0 0.0
        %479 = vmatpush1.xpose.msra.mxu0 0.0
        %480 = vmatprep.subr.mxu0 0.0
        %481 = vmatpush1.xpose.msra.mxu0 0.0
        %482 = vmatprep.subr.mxu0 0.0
        %483 = vmatpush1.xpose.msra.mxu0 0.0
        %484 = vmatprep.subr.mxu0 0.0
        %485 = vmatpush1.xpose.msra.mxu0 0.0
        %486 = vmatprep.subr.mxu0 0.0
        %487 = vmatpush1.xpose.msra.mxu0 0.0
        %488 = vmatprep.subr.mxu0 0.0
        %489 = vmatpush1.xpose.msra.mxu0 0.0
        %490 = vmatprep.subr.mxu0 0.0
        %491 = vmatpush1.xpose.msra.mxu0 0.0
        %492 = vmatprep.subr.mxu0 0.0
        %493 = vmatpush1.xpose.msra.mxu0 0.0
        %494 = vmatprep.subr.mxu0 0.0
        %495 = vmatpush1.xpose.msra.mxu0 0.0
        %496 = vmatprep.subr.mxu0 0.0
        %497 = vmatpush1.xpose.msra.mxu0 0.0
        %498 = vmatprep.subr.mxu0 0.0
        %499 = vmatpush1.xpose.msra.mxu0 0.0
        %500 = vmatprep.subr.mxu0 0.0
        %501 = vmatpush1.xpose.msra.mxu0 0.0
        %502 = vmatprep.subr.mxu0 0.0
        %503 = vmatpush1.xpose.msra.mxu0 0.0
        %504 = vmatprep.subr.mxu0 0.0
        %505 = vmatpush1.xpose.msra.mxu0 0.0
        %506 = vmatprep.subr.mxu0 0.0
        %507 = vmatpush1.xpose.msra.mxu0 0.0
        %508 = vmatprep.subr.mxu0 0.0
        %509 = vmatpush1.xpose.msra.mxu0 0.0
        %510 = vmatprep.subr.mxu0 0.0
        %511 = vmatpush1.xpose.msra.mxu0 0.0
        %512 = vmatprep.subr.mxu0 0.0
        %513 = vmatpush1.xpose.msra.mxu0 0.0
        %514 = vmatprep.subr.mxu0 0.0
        %515 = vmatpush1.xpose.msra.mxu0 0.0
        %516 = vmatprep.subr.mxu0 0.0
        %517 = vmatpush1.xpose.msra.mxu0 0.0
        %518 = vmatprep.subr.mxu0 0.0
        %519 = vmatpush1.xpose.msra.mxu0 0.0
        %520 = vmatprep.subr.mxu0 0.0
        %521 = vmatpush1.xpose.msra.mxu0 0.0
        %522 = vmatprep.subr.mxu0 0.0
        %523 = vmatpush1.xpose.msra.mxu0 0.0
        %524 = vmatprep.subr.mxu0 0.0
        %525 = vmatpush1.xpose.msra.mxu0 0.0
        %526 = vmatprep.subr.mxu0 0.0
        %527 = vmatpush1.xpose.msra.mxu0 0.0
        %528 = vmatprep.subr.mxu0 0.0
        %529 = vmatpush1.xpose.msra.mxu0 0.0
        %530 = vmatprep.subr.mxu0 0.0
        %531 = vmatpush1.xpose.msra.mxu0 0.0
        %532 = vmatprep.subr.mxu0 0.0
        %533 = vmatpush1.xpose.msra.mxu0 0.0
        %534 = vmatprep.subr.mxu0 0.0
        %535 = vmatpush1.xpose.msra.mxu0 0.0
        %536 = vmatprep.subr.mxu0 0.0
        %537 = vmatpush1.xpose.msra.mxu0 0.0
        %538 = vmatprep.subr.mxu0 0.0
        %539 = vmatpush1.xpose.msra.mxu0 0.0
        %540 = vmatprep.mubr.f32.mxu0 0.0
        %541 = vmatmul.mubr.f32.gmra.mrb[0].mxu0 %v472
        %v542 = vpop.f32.mrb[0].mxu0
        %v543 = vadd.f32 0.0, %v542
        %v544 = vpop.f32.mrb[0].mxu0
        %545 = vdwg.mxu0
        %v546 = vsel %vm306, %v543, -inf
        %547 = vmax.xlane.f32.xlu0 %v546
        %v548 = vpop.xlane.xlu0 %547
        %v549 = vsub.f32 %v543, %v548
        %v550 = vmul.f32 %v549, 1.442695
        %v551 = vpow.pop %v550
        %v552 = vsel %vm306, %v551, 0.0
        %553 = vadd.xlane.f32.xlu0 %v552
        %v554 = vpop.xlane.xlu0 %553
        %v555 = vrcp.pop %v554
        %v556 = vmul.f32 %v551, %v555
        %557 = vrot.lane.b32.xlu0 %v300, 56
        %v558 = vpop.permute.xlu0 %557
        %v561 = vsel %vm306, %v556, 0
        %563 = vmatprep.subr.mxu0 0.0
        %564 = vmatpush1.msra.mxu0 %v558
        %565 = vmatprep.subr.mxu0 0.0
        %566 = vmatpush1.msra.mxu0 0.0
        %567 = vmatprep.subr.mxu0 0.0
        %568 = vmatpush1.msra.mxu0 0.0
        %569 = vmatprep.subr.mxu0 0.0
        %570 = vmatpush1.msra.mxu0 0.0
        %571 = vmatprep.subr.mxu0 0.0
        %572 = vmatpush1.msra.mxu0 0.0
        %573 = vmatprep.subr.mxu0 0.0
        %574 = vmatpush1.msra.mxu0 0.0
        %575 = vmatprep.subr.mxu0 0.0
        %576 = vmatpush1.msra.mxu0 0.0
        %577 = vmatprep.subr.mxu0 0.0
        %578 = vmatpush1.msra.mxu0 0.0
        %579 = vmatprep.subr.mxu0 0.0
        %580 = vmatpush1.msra.mxu0 0.0
        %581 = vmatprep.subr.mxu0 0.0
        %582 = vmatpush1.msra.mxu0 0.0
        %583 = vmatprep.subr.mxu0 0.0
        %584 = vmatpush1.msra.mxu0 0.0
        %585 = vmatprep.subr.mxu0 0.0
        %586 = vmatpush1.msra.mxu0 0.0
        %587 = vmatprep.subr.mxu0 0.0
        %588 = vmatpush1.msra.mxu0 0.0
        %589 = vmatprep.subr.mxu0 0.0
        %590 = vmatpush1.msra.mxu0 0.0
        %591 = vmatprep.subr.mxu0 0.0
        %592 = vmatpush1.msra.mxu0 0.0
        %593 = vmatprep.subr.mxu0 0.0
        %594 = vmatpush1.msra.mxu0 0.0
        %595 = vmatprep.subr.mxu0 0.0
        %596 = vmatpush1.msra.mxu0 0.0
        %597 = vmatprep.subr.mxu0 0.0
        %598 = vmatpush1.msra.mxu0 0.0
        %599 = vmatprep.subr.mxu0 0.0
        %600 = vmatpush1.msra.mxu0 0.0
        %601 = vmatprep.subr.mxu0 0.0
        %602 = vmatpush1.msra.mxu0 0.0
        %603 = vmatprep.subr.mxu0 0.0
        %604 = vmatpush1.msra.mxu0 0.0
        %605 = vmatprep.subr.mxu0 0.0
        %606 = vmatpush1.msra.mxu0 0.0
        %607 = vmatprep.subr.mxu0 0.0
        %608 = vmatpush1.msra.mxu0 0.0
        %609 = vmatprep.subr.mxu0 0.0
        %610 = vmatpush1.msra.mxu0 0.0
        %611 = vmatprep.subr.mxu0 0.0
        %612 = vmatpush1.msra.mxu0 0.0
        %613 = vmatprep.subr.mxu0 0.0
        %614 = vmatpush1.msra.mxu0 0.0
        %615 = vmatprep.subr.mxu0 0.0
        %616 = vmatpush1.msra.mxu0 0.0
        %617 = vmatprep.subr.mxu0 0.0
        %618 = vmatpush1.msra.mxu0 0.0
        %619 = vmatprep.subr.mxu0 0.0
        %620 = vmatpush1.msra.mxu0 0.0
        %621 = vmatprep.subr.mxu0 0.0
        %622 = vmatpush1.msra.mxu0 0.0
        %623 = vmatprep.subr.mxu0 0.0
        %624 = vmatpush1.msra.mxu0 0.0
        %625 = vmatprep.subr.mxu0 0.0
        %626 = vmatpush1.msra.mxu0 0.0
        %627 = vmatprep.mubr.f32.mxu0 0.0
        %628 = vmatmul.mubr.f32.gmra.mrb[0].mxu0 %v561
        %v629 = vpop.f32.mrb[0].mxu0
        %v630 = vadd.f32 0.0, %v629
        %v631 = vpop.f32.mrb[0].mxu0
        %632 = vdwg.mxu0
        %633 = vrot.lane.b32.xlu0 %v300, 112
        %v634 = vpop.permute.xlu0 %633
        %635 = vrot.lane.b32.xlu0 %v300, 80
        %v636 = vpop.permute.xlu0 %635
        %v637 = vsel %vm306, %v634, 0
        %v639 = vsel %vm306, %v636, 0
        %641 = vmatprep.subr.mxu0 0.0
        %642 = vmatpush1.xpose.msra.mxu0 %v639
        %643 = vmatprep.subr.mxu0 0.0
        %644 = vmatpush1.xpose.msra.mxu0 0.0
        %645 = vmatprep.subr.mxu0 0.0
        %646 = vmatpush1.xpose.msra.mxu0 0.0
        %647 = vmatprep.subr.mxu0 0.0
        %648 = vmatpush1.xpose.msra.mxu0 0.0
        %649 = vmatprep.subr.mxu0 0.0
        %650 = vmatpush1.xpose.msra.mxu0 0.0
        %651 = vmatprep.subr.mxu0 0.0
        %652 = vmatpush1.xpose.msra.mxu0 0.0
        %653 = vmatprep.subr.mxu0 0.0
        %654 = vmatpush1.xpose.msra.mxu0 0.0
        %655 = vmatprep.subr.mxu0 0.0
        %656 = vmatpush1.xpose.msra.mxu0 0.0
        %657 = vmatprep.subr.mxu0 0.0
        %658 = vmatpush1.xpose.msra.mxu0 0.0
        %659 = vmatprep.subr.mxu0 0.0
        %660 = vmatpush1.xpose.msra.mxu0 0.0
        %661 = vmatprep.subr.mxu0 0.0
        %662 = vmatpush1.xpose.msra.mxu0 0.0
        %663 = vmatprep.subr.mxu0 0.0
        %664 = vmatpush1.xpose.msra.mxu0 0.0
        %665 = vmatprep.subr.mxu0 0.0
        %666 = vmatpush1.xpose.msra.mxu0 0.0
        %667 = vmatprep.subr.mxu0 0.0
        %668 = vmatpush1.xpose.msra.mxu0 0.0
        %669 = vmatprep.subr.mxu0 0.0
        %670 = vmatpush1.xpose.msra.mxu0 0.0
        %671 = vmatprep.subr.mxu0 0.0
        %672 = vmatpush1.xpose.msra.mxu0 0.0
        %673 = vmatprep.subr.mxu0 0.0
        %674 = vmatpush1.xpose.msra.mxu0 0.0
        %675 = vmatprep.subr.mxu0 0.0
        %676 = vmatpush1.xpose.msra.mxu0 0.0
        %677 = vmatprep.subr.mxu0 0.0
        %678 = vmatpush1.xpose.msra.mxu0 0.0
        %679 = vmatprep.subr.mxu0 0.0
        %680 = vmatpush1.xpose.msra.mxu0 0.0
        %681 = vmatprep.subr.mxu0 0.0
        %682 = vmatpush1.xpose.msra.mxu0 0.0
        %683 = vmatprep.subr.mxu0 0.0
        %684 = vmatpush1.xpose.msra.mxu0 0.0
        %685 = vmatprep.subr.mxu0 0.0
        %686 = vmatpush1.xpose.msra.mxu0 0.0
        %687 = vmatprep.subr.mxu0 0.0
        %688 = vmatpush1.xpose.msra.mxu0 0.0
        %689 = vmatprep.subr.mxu0 0.0
        %690 = vmatpush1.xpose.msra.mxu0 0.0
        %691 = vmatprep.subr.mxu0 0.0
        %692 = vmatpush1.xpose.msra.mxu0 0.0
        %693 = vmatprep.subr.mxu0 0.0
        %694 = vmatpush1.xpose.msra.mxu0 0.0
        %695 = vmatprep.subr.mxu0 0.0
        %696 = vmatpush1.xpose.msra.mxu0 0.0
        %697 = vmatprep.subr.mxu0 0.0
        %698 = vmatpush1.xpose.msra.mxu0 0.0
        %699 = vmatprep.subr.mxu0 0.0
        %700 = vmatpush1.xpose.msra.mxu0 0.0
        %701 = vmatprep.subr.mxu0 0.0
        %702 = vmatpush1.xpose.msra.mxu0 0.0
        %703 = vmatprep.subr.mxu0 0.0
        %704 = vmatpush1.xpose.msra.mxu0 0.0
        %705 = vmatprep.mubr.f32.mxu0 0.0
        %706 = vmatmul.mubr.f32.gmra.mrb[0].mxu0 %v637
        %v707 = vpop.f32.mrb[0].mxu0
        %v708 = vadd.f32 0.0, %v707
        %v709 = vpop.f32.mrb[0].mxu0
        %710 = vdwg.mxu0
        %v711 = vsel %vm306, %v708, -inf
        %712 = vmax.xlane.f32.xlu0 %v711
        %v713 = vpop.xlane.xlu0 %712
        %v714 = vsub.f32 %v708, %v713
        %v715 = vmul.f32 %v714, 1.442695
        %v716 = vpow.pop %v715
        %v717 = vsel %vm306, %v716, 0.0
        %718 = vadd.xlane.f32.xlu0 %v717
        %v719 = vpop.xlane.xlu0 %718
        %v720 = vrcp.pop %v719
        %v721 = vmul.f32 %v716, %v720
        %722 = vrot.lane.b32.xlu0 %v300, 48
        %v723 = vpop.permute.xlu0 %722
        %v726 = vsel %vm306, %v721, 0
        %728 = vmatprep.subr.mxu0 0.0
        %729 = vmatpush1.msra.mxu0 %v723
        %730 = vmatprep.subr.mxu0 0.0
        %731 = vmatpush1.msra.mxu0 0.0
        %732 = vmatprep.subr.mxu0 0.0
        %733 = vmatpush1.msra.mxu0 0.0
        %734 = vmatprep.subr.mxu0 0.0
        %735 = vmatpush1.msra.mxu0 0.0
        %736 = vmatprep.subr.mxu0 0.0
        %737 = vmatpush1.msra.mxu0 0.0
        %738 = vmatprep.subr.mxu0 0.0
        %739 = vmatpush1.msra.mxu0 0.0
        %740 = vmatprep.subr.mxu0 0.0
        %741 = vmatpush1.msra.mxu0 0.0
        %742 = vmatprep.subr.mxu0 0.0
        %743 = vmatpush1.msra.mxu0 0.0
        %744 = vmatprep.subr.mxu0 0.0
        %745 = vmatpush1.msra.mxu0 0.0
        %746 = vmatprep.subr.mxu0 0.0
        %747 = vmatpush1.msra.mxu0 0.0
        %748 = vmatprep.subr.mxu0 0.0
        %749 = vmatpush1.msra.mxu0 0.0
        %750 = vmatprep.subr.mxu0 0.0
        %751 = vmatpush1.msra.mxu0 0.0
        %752 = vmatprep.subr.mxu0 0.0
        %753 = vmatpush1.msra.mxu0 0.0
        %754 = vmatprep.subr.mxu0 0.0
        %755 = vmatpush1.msra.mxu0 0.0
        %756 = vmatprep.subr.mxu0 0.0
        %757 = vmatpush1.msra.mxu0 0.0
        %758 = vmatprep.subr.mxu0 0.0
        %759 = vmatpush1.msra.mxu0 0.0
        %760 = vmatprep.subr.mxu0 0.0
        %761 = vmatpush1.msra.mxu0 0.0
        %762 = vmatprep.subr.mxu0 0.0
        %763 = vmatpush1.msra.mxu0 0.0
        %764 = vmatprep.subr.mxu0 0.0
        %765 = vmatpush1.msra.mxu0 0.0
        %766 = vmatprep.subr.mxu0 0.0
        %767 = vmatpush1.msra.mxu0 0.0
        %768 = vmatprep.subr.mxu0 0.0
        %769 = vmatpush1.msra.mxu0 0.0
        %770 = vmatprep.subr.mxu0 0.0
        %771 = vmatpush1.msra.mxu0 0.0
        %772 = vmatprep.subr.mxu0 0.0
        %773 = vmatpush1.msra.mxu0 0.0
        %774 = vmatprep.subr.mxu0 0.0
        %775 = vmatpush1.msra.mxu0 0.0
        %776 = vmatprep.subr.mxu0 0.0
        %777 = vmatpush1.msra.mxu0 0.0
        %778 = vmatprep.subr.mxu0 0.0
        %779 = vmatpush1.msra.mxu0 0.0
        %780 = vmatprep.subr.mxu0 0.0
        %781 = vmatpush1.msra.mxu0 0.0
        %782 = vmatprep.subr.mxu0 0.0
        %783 = vmatpush1.msra.mxu0 0.0
        %784 = vmatprep.subr.mxu0 0.0
        %785 = vmatpush1.msra.mxu0 0.0
        %786 = vmatprep.subr.mxu0 0.0
        %787 = vmatpush1.msra.mxu0 0.0
        %788 = vmatprep.subr.mxu0 0.0
        %789 = vmatpush1.msra.mxu0 0.0
        %790 = vmatprep.subr.mxu0 0.0
        %791 = vmatpush1.msra.mxu0 0.0
        %792 = vmatprep.mubr.f32.mxu0 0.0
        %793 = vmatmul.mubr.f32.gmra.mrb[0].mxu0 %v726
        %v794 = vpop.f32.mrb[0].mxu0
        %v795 = vadd.f32 0.0, %v794
        %v796 = vpop.f32.mrb[0].mxu0
        %797 = vdwg.mxu0
        %798 = vrot.lane.b32.xlu0 %v300, 104
        %v799 = vpop.permute.xlu0 %798
        %800 = vrot.lane.b32.xlu0 %v300, 72
        %v801 = vpop.permute.xlu0 %800
        %v802 = vsel %vm306, %v799, 0
        %v804 = vsel %vm306, %v801, 0
        %806 = vmatprep.subr.mxu0 0.0
        %807 = vmatpush1.xpose.msra.mxu0 %v804
        %808 = vmatprep.subr.mxu0 0.0
        %809 = vmatpush1.xpose.msra.mxu0 0.0
        %810 = vmatprep.subr.mxu0 0.0
        %811 = vmatpush1.xpose.msra.mxu0 0.0
        %812 = vmatprep.subr.mxu0 0.0
        %813 = vmatpush1.xpose.msra.mxu0 0.0
        %814 = vmatprep.subr.mxu0 0.0
        %815 = vmatpush1.xpose.msra.mxu0 0.0
        %816 = vmatprep.subr.mxu0 0.0
        %817 = vmatpush1.xpose.msra.mxu0 0.0
        %818 = vmatprep.subr.mxu0 0.0
        %819 = vmatpush1.xpose.msra.mxu0 0.0
        %820 = vmatprep.subr.mxu0 0.0
        %821 = vmatpush1.xpose.msra.mxu0 0.0
        %822 = vmatprep.subr.mxu0 0.0
        %823 = vmatpush1.xpose.msra.mxu0 0.0
        %824 = vmatprep.subr.mxu0 0.0
        %825 = vmatpush1.xpose.msra.mxu0 0.0
        %826 = vmatprep.subr.mxu0 0.0
        %827 = vmatpush1.xpose.msra.mxu0 0.0
        %828 = vmatprep.subr.mxu0 0.0
        %829 = vmatpush1.xpose.msra.mxu0 0.0
        %830 = vmatprep.subr.mxu0 0.0
        %831 = vmatpush1.xpose.msra.mxu0 0.0
        %832 = vmatprep.subr.mxu0 0.0
        %833 = vmatpush1.xpose.msra.mxu0 0.0
        %834 = vmatprep.subr.mxu0 0.0
        %835 = vmatpush1.xpose.msra.mxu0 0.0
        %836 = vmatprep.subr.mxu0 0.0
        %837 = vmatpush1.xpose.msra.mxu0 0.0
        %838 = vmatprep.subr.mxu0 0.0
        %839 = vmatpush1.xpose.msra.mxu0 0.0
        %840 = vmatprep.subr.mxu0 0.0
        %841 = vmatpush1.xpose.msra.mxu0 0.0
        %842 = vmatprep.subr.mxu0 0.0
        %843 = vmatpush1.xpose.msra.mxu0 0.0
        %844 = vmatprep.subr.mxu0 0.0
        %845 = vmatpush1.xpose.msra.mxu0 0.0
        %846 = vmatprep.subr.mxu0 0.0
        %847 = vmatpush1.xpose.msra.mxu0 0.0
        %848 = vmatprep.subr.mxu0 0.0
        %849 = vmatpush1.xpose.msra.mxu0 0.0
        %850 = vmatprep.subr.mxu0 0.0
        %851 = vmatpush1.xpose.msra.mxu0 0.0
        %852 = vmatprep.subr.mxu0 0.0
        %853 = vmatpush1.xpose.msra.mxu0 0.0
        %854 = vmatprep.subr.mxu0 0.0
        %855 = vmatpush1.xpose.msra.mxu0 0.0
        %856 = vmatprep.subr.mxu0 0.0
        %857 = vmatpush1.xpose.msra.mxu0 0.0
        %858 = vmatprep.subr.mxu0 0.0
        %859 = vmatpush1.xpose.msra.mxu0 0.0
        %860 = vmatprep.subr.mxu0 0.0
        %861 = vmatpush1.xpose.msra.mxu0 0.0
        %862 = vmatprep.subr.mxu0 0.0
        %863 = vmatpush1.xpose.msra.mxu0 0.0
        %864 = vmatprep.subr.mxu0 0.0
        %865 = vmatpush1.xpose.msra.mxu0 0.0
        %866 = vmatprep.subr.mxu0 0.0
        %867 = vmatpush1.xpose.msra.mxu0 0.0
        %868 = vmatprep.subr.mxu0 0.0
        %869 = vmatpush1.xpose.msra.mxu0 0.0
        %870 = vmatprep.mubr.f32.mxu0 0.0
        %871 = vmatmul.mubr.f32.gmra.mrb[0].mxu0 %v802
        %v872 = vpop.f32.mrb[0].mxu0
        %v873 = vadd.f32 0.0, %v872
        %v874 = vpop.f32.mrb[0].mxu0
        %875 = vdwg.mxu0
        %v876 = vsel %vm306, %v873, -inf
        %877 = vmax.xlane.f32.xlu0 %v876
        %v878 = vpop.xlane.xlu0 %877
        %v879 = vsub.f32 %v873, %v878
        %v880 = vmul.f32 %v879, 1.442695
        %v881 = vpow.pop %v880
        %v882 = vsel %vm306, %v881, 0.0
        %883 = vadd.xlane.f32.xlu0 %v882
        %v884 = vpop.xlane.xlu0 %883
        %v885 = vrcp.pop %v884
        %v886 = vmul.f32 %v881, %v885
        %887 = vrot.lane.b32.xlu0 %v300, 40
        %v888 = vpop.permute.xlu0 %887
        %v891 = vsel %vm306, %v886, 0
        %893 = vmatprep.subr.mxu0 0.0
        %894 = vmatpush1.msra.mxu0 %v888
        %895 = vmatprep.subr.mxu0 0.0
        %896 = vmatpush1.msra.mxu0 0.0
        %897 = vmatprep.subr.mxu0 0.0
        %898 = vmatpush1.msra.mxu0 0.0
        %899 = vmatprep.subr.mxu0 0.0
        %900 = vmatpush1.msra.mxu0 0.0
        %901 = vmatprep.subr.mxu0 0.0
        %902 = vmatpush1.msra.mxu0 0.0
        %903 = vmatprep.subr.mxu0 0.0
        %904 = vmatpush1.msra.mxu0 0.0
        %905 = vmatprep.subr.mxu0 0.0
        %906 = vmatpush1.msra.mxu0 0.0
        %907 = vmatprep.subr.mxu0 0.0
        %908 = vmatpush1.msra.mxu0 0.0
        %909 = vmatprep.subr.mxu0 0.0
        %910 = vmatpush1.msra.mxu0 0.0
        %911 = vmatprep.subr.mxu0 0.0
        %912 = vmatpush1.msra.mxu0 0.0
        %913 = vmatprep.subr.mxu0 0.0
        %914 = vmatpush1.msra.mxu0 0.0
        %915 = vmatprep.subr.mxu0 0.0
        %916 = vmatpush1.msra.mxu0 0.0
        %917 = vmatprep.subr.mxu0 0.0
        %918 = vmatpush1.msra.mxu0 0.0
        %919 = vmatprep.subr.mxu0 0.0
        %920 = vmatpush1.msra.mxu0 0.0
        %921 = vmatprep.subr.mxu0 0.0
        %922 = vmatpush1.msra.mxu0 0.0
        %923 = vmatprep.subr.mxu0 0.0
        %924 = vmatpush1.msra.mxu0 0.0
        %925 = vmatprep.subr.mxu0 0.0
        %926 = vmatpush1.msra.mxu0 0.0
        %927 = vmatprep.subr.mxu0 0.0
        %928 = vmatpush1.msra.mxu0 0.0
        %929 = vmatprep.subr.mxu0 0.0
        %930 = vmatpush1.msra.mxu0 0.0
        %931 = vmatprep.subr.mxu0 0.0
        %932 = vmatpush1.msra.mxu0 0.0
        %933 = vmatprep.subr.mxu0 0.0
        %934 = vmatpush1.msra.mxu0 0.0
        %935 = vmatprep.subr.mxu0 0.0
        %936 = vmatpush1.msra.mxu0 0.0
        %937 = vmatprep.subr.mxu0 0.0
        %938 = vmatpush1.msra.mxu0 0.0
        %939 = vmatprep.subr.mxu0 0.0
        %940 = vmatpush1.msra.mxu0 0.0
        %941 = vmatprep.subr.mxu0 0.0
        %942 = vmatpush1.msra.mxu0 0.0
        %943 = vmatprep.subr.mxu0 0.0
        %944 = vmatpush1.msra.mxu0 0.0
        %945 = vmatprep.subr.mxu0 0.0
        %946 = vmatpush1.msra.mxu0 0.0
        %947 = vmatprep.subr.mxu0 0.0
        %948 = vmatpush1.msra.mxu0 0.0
        %949 = vmatprep.subr.mxu0 0.0
        %950 = vmatpush1.msra.mxu0 0.0
        %951 = vmatprep.subr.mxu0 0.0
        %952 = vmatpush1.msra.mxu0 0.0
        %953 = vmatprep.subr.mxu0 0.0
        %954 = vmatpush1.msra.mxu0 0.0
        %955 = vmatprep.subr.mxu0 0.0
        %956 = vmatpush1.msra.mxu0 0.0
        %957 = vmatprep.mubr.f32.mxu0 0.0
        %958 = vmatmul.mubr.f32.gmra.mrb[0].mxu0 %v891
        %v959 = vpop.f32.mrb[0].mxu0
        %v960 = vadd.f32 0.0, %v959
        %v961 = vpop.f32.mrb[0].mxu0
        %962 = vdwg.mxu0
        %964 = vrot.lane.b32.xlu0 %v630, 8
        %v965 = vpop.permute.xlu0 %964
        %968 = vrot.lane.b32.xlu0 %v795, 16
        %v969 = vpop.permute.xlu0 %968
        %972 = vrot.lane.b32.xlu0 %v960, 24
        %v973 = vpop.permute.xlu0 %972
        %v975 = vsel %vm306, %v465, %v965
        %vm976 = vcmask 130048
        %v977 = vsel %vm976, %v975, %v969
        %vm978 = vcmask 195584
        %v979 = vsel %vm978, %v977, %v973
        %v980 = vld [vmem:[%s2] sm:$0xff]
        %v981 = vld [vmem:[%s2 + $0x8] sm:$0xff]
        %v982 = vld [vmem:[%s2 + $0x10] sm:$0xff]
        %v983 = vld [vmem:[%s2 + $0x18] sm:$0xff]
        %v985 = vsel %vm193, %v979, 0
        %v988 = vsel %vm193, %v980, 0
        %v991 = vsel %vm193, %v981, 0
        %v994 = vsel %vm193, %v982, 0
        %v997 = vsel %vm193, %v983, 0
        %999 = vmatprep.subr.mxu0 0.0
        %1000 = vmatpush1.xpose.msra.mxu0 %v988
        %1001 = vmatprep.subr.mxu0 0.0
        %1002 = vmatpush1.xpose.msra.mxu0 %v991
        %1003 = vmatprep.subr.mxu0 0.0
        %1004 = vmatpush1.xpose.msra.mxu0 %v994
        %1005 = vmatprep.subr.mxu0 0.0
        %1006 = vmatpush1.xpose.msra.mxu0 %v997
        %1007 = vmatprep.subr.mxu0 0.0
        %1008 = vmatpush1.xpose.msra.mxu0 0.0
        %1009 = vmatprep.subr.mxu0 0.0
        %1010 = vmatpush1.xpose.msra.mxu0 0.0
        %1011 = vmatprep.subr.mxu0 0.0
        %1012 = vmatpush1.xpose.msra.mxu0 0.0
        %1013 = vmatprep.subr.mxu0 0.0
        %1014 = vmatpush1.xpose.msra.mxu0 0.0
        %1015 = vmatprep.subr.mxu0 0.0
        %1016 = vmatpush1.xpose.msra.mxu0 0.0
        %1017 = vmatprep.subr.mxu0 0.0
        %1018 = vmatpush1.xpose.msra.mxu0 0.0
        %1019 = vmatprep.subr.mxu0 0.0
        %1020 = vmatpush1.xpose.msra.mxu0 0.0
        %1021 = vmatprep.subr.mxu0 0.0
        %1022 = vmatpush1.xpose.msra.mxu0 0.0
        %1023 = vmatprep.subr.mxu0 0.0
        %1024 = vmatpush1.xpose.msra.mxu0 0.0
        %1025 = vmatprep.subr.mxu0 0.0
        %1026 = vmatpush1.xpose.msra.mxu0 0.0
        %1027 = vmatprep.subr.mxu0 0.0
        %1028 = vmatpush1.xpose.msra.mxu0 0.0
        %1029 = vmatprep.subr.mxu0 0.0
        %1030 = vmatpush1.xpose.msra.mxu0 0.0
        %1031 = vmatprep.subr.mxu0 0.0
        %1032 = vmatpush1.xpose.msra.mxu0 0.0
        %1033 = vmatprep.subr.mxu0 0.0
        %1034 = vmatpush1.xpose.msra.mxu0 0.0
        %1035 = vmatprep.subr.mxu0 0.0
        %1036 = vmatpush1.xpose.msra.mxu0 0.0
        %1037 = vmatprep.subr.mxu0 0.0
        %1038 = vmatpush1.xpose.msra.mxu0 0.0
        %1039 = vmatprep.subr.mxu0 0.0
        %1040 = vmatpush1.xpose.msra.mxu0 0.0
        %1041 = vmatprep.subr.mxu0 0.0
        %1042 = vmatpush1.xpose.msra.mxu0 0.0
        %1043 = vmatprep.subr.mxu0 0.0
        %1044 = vmatpush1.xpose.msra.mxu0 0.0
        %1045 = vmatprep.subr.mxu0 0.0
        %1046 = vmatpush1.xpose.msra.mxu0 0.0
        %1047 = vmatprep.subr.mxu0 0.0
        %1048 = vmatpush1.xpose.msra.mxu0 0.0
        %1049 = vmatprep.subr.mxu0 0.0
        %1050 = vmatpush1.xpose.msra.mxu0 0.0
        %1051 = vmatprep.subr.mxu0 0.0
        %1052 = vmatpush1.xpose.msra.mxu0 0.0
        %1053 = vmatprep.subr.mxu0 0.0
        %1054 = vmatpush1.xpose.msra.mxu0 0.0
        %1055 = vmatprep.subr.mxu0 0.0
        %1056 = vmatpush1.xpose.msra.mxu0 0.0
        %1057 = vmatprep.subr.mxu0 0.0
        %1058 = vmatpush1.xpose.msra.mxu0 0.0
        %1059 = vmatprep.subr.mxu0 0.0
        %1060 = vmatpush1.xpose.msra.mxu0 0.0
        %1061 = vmatprep.subr.mxu0 0.0
        %1062 = vmatpush1.xpose.msra.mxu0 0.0
        %1063 = vmatprep.mubr.f32.mxu0 0.0
        %1064 = vmatmul.mubr.f32.gmra.mrb[0].mxu0 %v985
        %v1065 = vpop.f32.mrb[0].mxu0
        %v1066 = vadd.f32 0.0, %v1065
        %v1067 = vpop.f32.mrb[0].mxu0
        %1068 = vdwg.mxu0
        %1069 = vst.msk [vmem:[%s175] sm:$0xff] %vm193, %v1066
        %s1070 = sand.u32 %s107, 1
        %s1071 = scalar_lea.sflag [#allocation3], %s1070
        %s1072 = sand.u32 %s107, 1
        %s1073 = smul.addr %s1072, 8
        %s1074 = scalar_lea.vmem [#allocation2], %s1073
        // Predicated region
        $region33: #{tpu_custom_call.1} parent=31 // pred_check
          %p1075 = pneg %p117
        $region34: #{tpu_custom_call.1} parent=31 // pred_check_branch
          %1077 = sbr.rel (%p1075) target = $region36
        $region35: #{tpu_custom_call.1} parent=31 // pred_region
          %s1079 = ssub.s32 128, 128
          %1080 = vsyncadd %s1071, %s1079
          %s1081 = sadd.s32 %s22, %s21
          %s1082 = smul.addr %s1081, 128
          %s1083 = scalar_lea.hbm %s3, %s1082
          %s1085 = sshll.u32 %s1074, 4
          %s1086 = int_to_ptr.vmem [resolvable:$true] %s1085
          %1088 = dma.vmem_to_hbm [thread:$0]  %s1086, 128, %s1083, %s1071
        $region36: #{tpu_custom_call.1} parent=31 // pred_fallthru
          _
      $region32: #{tpu_custom_call.1} parent=5 // pred_fallthru
        _
      %p1089 = scmp.le.s32.totalorder 2, %s12
      // Predicated region
      $region37: #{tpu_custom_call.1} parent=5 // pred_check
        %p1090 = pneg %p1089
      $region38: #{tpu_custom_call.1} parent=5 // pred_check_branch
        %1092 = sbr.rel (%p1090) target = $region40
      $region39: #{tpu_custom_call.1} parent=5 // pred_region
        %s1093 = ssub.s32 %s12, 2
        // Predicated region
        $region41: #{tpu_custom_call.1} parent=39 // pred_check
          %p1094 = pneg %p123
        $region42: #{tpu_custom_call.1} parent=39 // pred_check_branch
          %1096 = sbr.rel (%p1094) target = $region44
        $region43: #{tpu_custom_call.1} parent=39 // pred_region
          %s1097 = sand.u32 %s108, 1
          %s1098 = scalar_lea.sflag [#allocation3], %s1097
          %s1099 = sand.u32 %s108, 1
          %s1100 = smul.addr %s1099, 8
          %s1101 = scalar_lea.vmem [#allocation2], %s1100
          %1102 = dma.done %s1098, 128
        $region44: #{tpu_custom_call.1} parent=39 // pred_fallthru
          _
      $region40: #{tpu_custom_call.1} parent=5 // pred_fallthru
        _
    $region6: #{tpu_custom_call.1} parent=1 // loop_footer
      %s16 = sadd.s32 1, %s12
    $region7: #{tpu_custom_call.1} parent=1 // loop_footer_branch
      %11 = sbr.rel target = $region3
    $region8: #{tpu_custom_call.1} parent=1 // loop_exit
      _
    %1103 = vsyncpa [#allocation3], 1
    %s1104 = scalar_lea.sflag [#allocation3], 1
    %1105 = vsyncpa %s1104, 1

</llo_original>
